<compile_context>
chip_gen: v7x
topology: tpu7x:2x2x1
jax: 0.10.0
libtpu: 0.0.40
codegen_flags: <defaults>
</compile_context>

<pallas_src>
import functools
import math

import jax
import jax.numpy as jnp
from jax.experimental import pallas as pl
from jax.experimental.pallas import tpu as pltpu


# ----------------------------------------------------------------------------
# Helpers
# ----------------------------------------------------------------------------
def _round_up(x, m):
    return (x + m - 1) // m * m


def _log_softmax(x):
    m = jnp.max(x, axis=1, keepdims=True)
    return (x - m) - jnp.log(jnp.sum(jnp.exp(x - m), axis=1, keepdims=True))


def _vmem_capacity_bytes():
    try:
        return int(getattr(pltpu.get_tpu_info(), "vmem_capacity_bytes", 64 << 20))
    except Exception:
        return 64 << 20   # conservative fallback (v7x per-TC VMEM)


def _choose_tk(D, N, Np, max_batch, max_tk):
    """Largest K tile (multiple of 128) that fits double-buffered in VMEM and
    divides the padded D. Returns (tk, Dp)."""
    cap = _vmem_capacity_bytes()
    # Leave headroom for compiler-internal scratch; v7x has only 64 MiB per TC.
    budget = max(min(int(cap * 0.75), cap - (16 << 20)), 8 << 20)
    # Resident (constant-index) buffers: bias, student class/dist logits, labels
    # (double-buffered by BlockSpec) + the f32 accumulator scratch.
    resident = 2 * (Np * 4 + 2 * max_batch * N * 4 + max_batch * 4) + max_batch * Np * 4
    avail = max(budget - resident, 2 << 20)
    # Streamed, double-buffered: f32 x tile (max_batch, tk) + bf16 w tile (tk, Np).
    tk_cap = avail // (2 * (4 * max_batch + 2 * Np))
    tk_cap = max(128, min(max_tk, (tk_cap // 128) * 128))
    Dp0 = _round_up(D, 128)
    if Dp0 <= tk_cap:
        return Dp0, Dp0
    q = Dp0 // 128
    best = 1
    for d in range(1, tk_cap // 128 + 1):
        if q % d == 0:
            best = d
    return 128 * best, Dp0


def prepare_teacher(teacher_w, teacher_b, *, max_batch=256, max_tk=8192):
    """Pad + cast the (static) teacher parameters ONCE, outside the per-call path.

    The bf16 weight is padded to (Dp, Np): Np lane-dense (multiple of 128), Dp a
    multiple of the chosen K tile, so the per-call kernel streams it with zero
    wrapper copies.
    """
    D, N = teacher_w.shape
    Np = _round_up(N, 128)
    tk, Dp = _choose_tk(D, N, Np, max_batch, max_tk)
    w_pad = jnp.zeros((Dp, Np), jnp.bfloat16).at[:D, :N].set(
        teacher_w.astype(jnp.bfloat16))
    b_pad = jnp.zeros((1, Np), jnp.float32).at[0, :N].set(
        teacher_b.reshape(-1).astype(jnp.float32))
    w_pad, b_pad = jax.block_until_ready((w_pad, b_pad))
    return dict(w=w_pad, b=b_pad, D=D, Dp=Dp, N=N, Np=Np, tk=tk, nk=Dp // tk)


# ----------------------------------------------------------------------------
# Kernel 1: base cross-entropy only ('none' path) — no teacher work at all.
# ----------------------------------------------------------------------------
def _base_only_kernel(s_ref, lab_ref, o_ref, *, B):
    s = s_ref[...].astype(jnp.float32)
    col = jax.lax.broadcasted_iota(jnp.int32, s.shape, 1)
    oh = (col == lab_ref[...]).astype(jnp.float32)
    o_ref[0, 0] = -jnp.sum(oh * _log_softmax(s)) * (1.0 / B)


# ----------------------------------------------------------------------------
# Kernel 2: fused teacher matmul (K-tiled, bf16 MXU / f32 acc) + loss epilogue.
# ----------------------------------------------------------------------------
def _fused_kernel(x_ref, w_ref, b_ref, s_ref, kd_ref, lab_ref, o_ref, acc_ref,
                  *, B, N, distillation_type, alpha, tau):
    k = pl.program_id(0)

    # Initialize the accumulator with the broadcast bias (added exactly once).
    @pl.when(k == 0)
    def _():
        acc_ref[...] = jnp.broadcast_to(b_ref[...], acc_ref.shape)

    # MXU: bf16 x bf16 -> f32 accumulate (x cast in-kernel; w is pre-cast bf16).
    acc_ref[...] += jnp.dot(x_ref[...].astype(jnp.bfloat16), w_ref[...],
                            preferred_element_type=jnp.float32)

    # Loss epilogue hides under the last K step.
    @pl.when(k == pl.num_programs(0) - 1)
    def _():
        Np = acc_ref.shape[1]
        t_full = acc_ref[...]
        t = t_full[:, :N] if N < Np else t_full      # (B, N) teacher logits
        s = s_ref[...].astype(jnp.float32)           # (B, N) student class logits
        kd = kd_ref[...].astype(jnp.float32)         # (B, N) student dist logits
        lab = lab_ref[...]                           # (B, 1) int32

        col = jax.lax.broadcasted_iota(jnp.int32, (B, N), 1)

        # base_criterion: cross-entropy with integer labels, mean over batch.
        oh = (col == lab).astype(jnp.float32)
        base_loss = -jnp.sum(oh * _log_softmax(s)) * (1.0 / B)

        if distillation_type == "soft":
            # F.kl_div(log_softmax(kd/T), log_softmax(t/T), 'sum', log_target=True)
            #   * T*T / kd.numel()
            inv_tau = 1.0 / tau
            kd_logp = _log_softmax(kd * inv_tau)
            ts = t * inv_tau
            tm = jnp.max(ts, axis=1, keepdims=True)
            te = jnp.exp(ts - tm)
            tz = jnp.sum(te, axis=1, keepdims=True)
            t_logp = (ts - tm) - jnp.log(tz)
            t_p = te * pl.reciprocal(tz, approx=True)   # reuse exp pass, EUP recip
            kl_sum = jnp.sum(t_p * (t_logp - kd_logp))
            distill_loss = kl_sum * (tau * tau / (B * N))
        else:  # 'hard'
            # F.cross_entropy(kd, t.argmax(dim=1)) with first-max tie-break.
            mx = jnp.max(t, axis=1, keepdims=True)
            arg = jnp.min(jnp.where(t == mx, col, N), axis=1, keepdims=True)
            t_oh = (col == arg).astype(jnp.float32)
            distill_loss = -jnp.sum(t_oh * _log_softmax(kd)) * (1.0 / B)

        o_ref[0, 0] = base_loss * (1.0 - alpha) + distill_loss * alpha


# ----------------------------------------------------------------------------
# Wrapper mirroring DistillationLoss.forward for outputs = (class, dist) logits.
# ----------------------------------------------------------------------------
def distillation_loss(inputs, outputs, outputs_kd, labels, teacher=None,
                      *, distillation_type="soft", alpha=0.5, tau=1.0):
    assert distillation_type in ("none", "soft", "hard")
    B, N = outputs.shape
    lab2 = labels.astype(jnp.int32).reshape(B, 1)

    if distillation_type == "none":
        kern = functools.partial(_base_only_kernel, B=B)
        loss = pl.pallas_call(
            kern,
            out_shape=jax.ShapeDtypeStruct((1, 1), jnp.float32),
            grid=(1,),
            in_specs=[
                pl.BlockSpec((B, N), lambda i: (0, 0)),   # full-extent, unpadded
                pl.BlockSpec((B, 1), lambda i: (0, 0)),
            ],
            out_specs=pl.BlockSpec(memory_space=pltpu.SMEM),
        )(outputs.astype(jnp.float32), lab2)
        return loss[0, 0]

    assert teacher is not None and teacher["N"] == N
    D, Dp, Np = teacher["D"], teacher["Dp"], teacher["Np"]
    tk, nk = teacher["tk"], teacher["nk"]

    # teacher_model(inputs): flatten NCHW row-major; stream f32, cast in-kernel.
    x = inputs.reshape(B, -1).astype(jnp.float32)
    assert x.shape[1] == D
    if Dp != D:   # only when D is not a multiple of 128 (rare)
        x = jnp.zeros((B, Dp), jnp.float32).at[:, :D].set(x)

    # Exact double-buffered VMEM bytes + headroom, capped below physical VMEM.
    cap = _vmem_capacity_bytes()
    streamed = 2 * (B * tk * 4 + tk * Np * 2)
    resident = 2 * (Np * 4 + 2 * B * N * 4 + B * 4) + B * Np * 4
    vmem_limit = streamed + resident + (8 << 20)
    vmem_limit = int(min(max(vmem_limit, 32 << 20), cap - (8 << 20)))

    cost = pl.CostEstimate(
        flops=2 * B * Dp * Np,
        transcendentals=5 * B * N,
        bytes_accessed=Dp * Np * 2 + B * Dp * 4 + 2 * B * N * 4 + Np * 4 + B * 4 + 4)

    kern = functools.partial(
        _fused_kernel, B=B, N=N,
        distillation_type=distillation_type,
        alpha=float(alpha), tau=float(tau))

    loss = pl.pallas_call(
        kern,
        out_shape=jax.ShapeDtypeStruct((1, 1), jnp.float32),
        grid_spec=pltpu.PrefetchScalarGridSpec(
            num_scalar_prefetch=0,
            grid=(nk,),
            in_specs=[
                pl.BlockSpec((B, tk), lambda k: (0, k)),   # x (f32, streamed)
                pl.BlockSpec((tk, Np), lambda k: (k, 0)),  # w (bf16, streamed)
                pl.BlockSpec((1, Np), lambda k: (0, 0)),   # bias (resident)
                pl.BlockSpec((B, N), lambda k: (0, 0)),    # student class logits
                pl.BlockSpec((B, N), lambda k: (0, 0)),    # student dist logits
                pl.BlockSpec((B, 1), lambda k: (0, 0)),    # labels
            ],
            out_specs=pl.BlockSpec(memory_space=pltpu.SMEM),
            scratch_shapes=[pltpu.VMEM((B, Np), jnp.float32)],
        ),
        compiler_params=pltpu.CompilerParams(
            dimension_semantics=("arbitrary",),   # K is a reduction axis
            vmem_limit_bytes=vmem_limit,
        ),
        cost_estimate=cost,
    )(x, teacher["w"], teacher["b"],
      outputs.astype(jnp.float32), outputs_kd.astype(jnp.float32), lab2)
    return loss[0, 0]


# ----------------------------------------------------------------------------
# Pure-JAX reference (teacher also goes through bf16 weights, as the kernel does).
# ----------------------------------------------------------------------------
def _ref_loss(inputs, outputs, outputs_kd, labels, w, b,
              distillation_type, alpha, tau):
    B, N = outputs.shape
    xb = inputs.reshape(B, -1).astype(jnp.bfloat16).astype(jnp.float32)
    wb = w.astype(jnp.bfloat16).astype(jnp.float32)
    t = jnp.dot(xb, wb, precision=jax.lax.Precision.HIGHEST) + b.reshape(-1)
    oh = jax.nn.one_hot(labels, N, dtype=jnp.float32)
    base = -jnp.sum(oh * jax.nn.log_softmax(outputs, axis=1)) / B
    if distillation_type == "none":
        return base
    if distillation_type == "soft":
        s_lp = jax.nn.log_softmax(outputs_kd / tau, axis=1)
        t_lp = jax.nn.log_softmax(t / tau, axis=1)
        d = jnp.sum(jnp.exp(t_lp) * (t_lp - s_lp)) * (tau * tau) / (B * N)
    else:
        t_oh = jax.nn.one_hot(jnp.argmax(t, axis=1), N, dtype=jnp.float32)
        d = -jnp.sum(t_oh * jax.nn.log_softmax(outputs_kd, axis=1)) / B
    return base * (1 - alpha) + d * alpha


if __name__ == "__main__":
    key = jax.random.PRNGKey(0)
    k1, k2, k3, k4, k5 = jax.random.split(key, 5)

    B, C, H, W = 2, 4, 16, 16
    NUM_CLASSES = 32
    D = C * H * W
    alpha, tau = 0.5, 2.0

    inputs = jax.random.normal(k1, (B, C, H, W), dtype=jnp.float32)
    outputs = jax.random.normal(k2, (B, NUM_CLASSES), dtype=jnp.float32)
    outputs_kd = jax.random.normal(k3, (B, NUM_CLASSES), dtype=jnp.float32)
    labels = jax.random.randint(k4, (B,), 0, NUM_CLASSES, dtype=jnp.int32)

    # Deterministic synthetic teacher parameters (linear classifier).
    teacher_w = 0.02 * jax.random.normal(k5, (D, NUM_CLASSES), dtype=jnp.float32)
    teacher_b = jnp.zeros((1, NUM_CLASSES), dtype=jnp.float32)

    # Hoisted: pad + bf16-cast the static teacher weight exactly once.
    teacher = prepare_teacher(teacher_w, teacher_b)

    ok = True
    for dt in ("soft", "hard", "none"):
        loss = distillation_loss(
            inputs, outputs, outputs_kd, labels,
            teacher=None if dt == "none" else teacher,
            distillation_type=dt, alpha=alpha, tau=tau)
        loss = jax.block_until_ready(loss)
        ref = _ref_loss(inputs, outputs, outputs_kd, labels,
                        teacher_w, teacher_b, dt, alpha, tau)
        if not jnp.allclose(loss, ref, rtol=2e-3, atol=2e-3):
            ok = False
            print("MISMATCH", dt, float(loss), float(ref))
    assert ok
    print("KERNEL_OK")
</pallas_src>

<mosaic_0001>
module attributes {stable_mosaic.version = 11 : i64} {
  func.func @_fused_kernel(%arg0: i32, %arg1: memref<2x1024xf32, #tpu.memory_space<vmem>>, %arg2: memref<1024x128xbf16, #tpu.memory_space<vmem>>, %arg3: memref<1x128xf32, #tpu.memory_space<vmem>>, %arg4: memref<2x32xf32, #tpu.memory_space<vmem>>, %arg5: memref<2x32xf32, #tpu.memory_space<vmem>>, %arg6: memref<2x1xi32, #tpu.memory_space<vmem>>, %arg7: memref<1x1xf32, #tpu.memory_space<smem>>, %arg8: memref<2x128xf32, #tpu.memory_space<vmem>>) attributes {dimension_semantics = [#tpu.dimension_semantics<arbitrary>], iteration_bounds = array<i64: 1>, scalar_prefetch = 0 : i64, scratch_operands = 1 : i64, tpu.core_type = #tpu.core_type<tc>, window_params = [{transform_indices = @transform_0, window_bounds = array<i64: 2, 1024>}, {transform_indices = @transform_1, window_bounds = array<i64: 1024, 128>}, {pipeline_mode = #tpu.pipeline_mode<synchronous>, transform_indices = @transform_2, window_bounds = array<i64: 1, 128>}, {pipeline_mode = #tpu.pipeline_mode<synchronous>, transform_indices = @transform_3, window_bounds = array<i64: 2, 32>}, {pipeline_mode = #tpu.pipeline_mode<synchronous>, transform_indices = @transform_4, window_bounds = array<i64: 2, 32>}, {pipeline_mode = #tpu.pipeline_mode<synchronous>, transform_indices = @transform_5, window_bounds = array<i64: 2, 1>}, {transform_indices = @transform_6, window_bounds = array<i64: 1, 1>}]} {
    %c0_i32 = arith.constant 0 : i32
    %0 = arith.cmpi eq, %arg0, %c0_i32 : i32
    %1 = arith.extui %0 : i1 to i32
    %c0_i32_0 = arith.constant 0 : i32
    %2 = arith.cmpi ne, %1, %c0_i32_0 : i32
    scf.if %2 {
      %c0_10 = arith.constant 0 : index
      %c0_11 = arith.constant 0 : index
      %13 = vector.load %arg3[%c0_10, %c0_11] : memref<1x128xf32, #tpu.memory_space<vmem>>, vector<1x128xf32>
      %14 = vector.shape_cast %13 : vector<1x128xf32> to vector<1x128xf32>
      %15 = vector.broadcast %14 : vector<1x128xf32> to vector<2x128xf32>
      %c0_12 = arith.constant 0 : index
      %c0_13 = arith.constant 0 : index
      %16 = vector.load %arg8[%c0_12, %c0_13] : memref<2x128xf32, #tpu.memory_space<vmem>>, vector<2x128xf32>
      tpu.vector_store %arg8[%c0_12, %c0_13], %15 {strides = array<i32>} : memref<2x128xf32, #tpu.memory_space<vmem>>, vector<2x128xf32>,
    } else {
    }
    %c0 = arith.constant 0 : index
    %c0_1 = arith.constant 0 : index
    %3 = vector.load %arg8[%c0, %c0_1] : memref<2x128xf32, #tpu.memory_space<vmem>>, vector<2x128xf32>
    %c0_2 = arith.constant 0 : index
    %c0_3 = arith.constant 0 : index
    %4 = vector.load %arg1[%c0_2, %c0_3] : memref<2x1024xf32, #tpu.memory_space<vmem>>, vector<2x1024xf32>
    %5 = arith.truncf %4 : vector<2x1024xf32> to vector<2x1024xbf16>
    %c0_4 = arith.constant 0 : index
    %c0_5 = arith.constant 0 : index
    %6 = vector.load %arg2[%c0_4, %c0_5] : memref<1024x128xbf16, #tpu.memory_space<vmem>>, vector<1024x128xbf16>
    %cst = arith.constant dense<0.000000e+00> : vector<2x128xf32>
    %7 = tpu.matmul %5, %6, %cst {dimension_numbers = #tpu.dot_dimension_numbers<[1], [0], [0], [1], [0, 0, 1, 1], [], []>} : vector<2x1024xbf16>, vector<1024x128xbf16>, vector<2x128xf32> -> vector<2x128xf32>
    %8 = arith.addf %3, %7 : vector<2x128xf32>
    %c0_6 = arith.constant 0 : index
    %c0_7 = arith.constant 0 : index
    %9 = vector.load %arg8[%c0_6, %c0_7] : memref<2x128xf32, #tpu.memory_space<vmem>>, vector<2x128xf32>
    tpu.vector_store %arg8[%c0_6, %c0_7], %8 {strides = array<i32>} : memref<2x128xf32, #tpu.memory_space<vmem>>, vector<2x128xf32>,
    %c0_i32_8 = arith.constant 0 : i32
    %10 = arith.cmpi eq, %arg0, %c0_i32_8 : i32
    %11 = arith.extui %10 : i1 to i32
    %c0_i32_9 = arith.constant 0 : i32
    %12 = arith.cmpi ne, %11, %c0_i32_9 : i32
    scf.if %12 {
      %c0_10 = arith.constant 0 : index
      %c0_11 = arith.constant 0 : index
      %13 = vector.load %arg8[%c0_10, %c0_11] : memref<2x128xf32, #tpu.memory_space<vmem>>, vector<2x128xf32>
      %14 = vector.extract_strided_slice %13 {offsets = [0, 0], sizes = [2, 32], strides = [1, 1]} : vector<2x128xf32> to vector<2x32xf32>
      %c0_12 = arith.constant 0 : index
      %c0_13 = arith.constant 0 : index
      %15 = vector.load %arg4[%c0_12, %c0_13] : memref<2x32xf32, #tpu.memory_space<vmem>>, vector<2x32xf32>
      %c0_14 = arith.constant 0 : index
      %c0_15 = arith.constant 0 : index
      %16 = vector.load %arg5[%c0_14, %c0_15] : memref<2x32xf32, #tpu.memory_space<vmem>>, vector<2x32xf32>
      %c0_16 = arith.constant 0 : index
      %c0_17 = arith.constant 0 : index
      %17 = vector.load %arg6[%c0_16, %c0_17] : memref<2x1xi32, #tpu.memory_space<vmem>>, vector<2x1xi32>
      %18 = tpu.iota {dimensions = array<i32: 1>} : vector<2x32xi32>
      %19 = vector.broadcast %17 : vector<2x1xi32> to vector<2x32xi32>
      %20 = arith.cmpi eq, %18, %19 : vector<2x32xi32>
      %21 = arith.extui %20 : vector<2x32xi1> to vector<2x32xi32>
      %22 = arith.sitofp %21 : vector<2x32xi32> to vector<2x32xf32>
      %cst_18 = arith.constant dense<0xFF800000> : vector<2xf32>
      %23 = vector.multi_reduction <maximumf>, %15, %cst_18 [1] : vector<2x32xf32> to vector<2xf32>
      %24 = vector.shape_cast %23 : vector<2xf32> to vector<2x1xf32>
      %25 = vector.broadcast %24 : vector<2x1xf32> to vector<2x32xf32>
      %26 = arith.subf %15, %25 : vector<2x32xf32>
      %27 = vector.broadcast %24 : vector<2x1xf32> to vector<2x32xf32>
      %28 = arith.subf %15, %27 : vector<2x32xf32>
      %29 = math.exp %28 : vector<2x32xf32>
      %cst_19 = arith.constant dense<0.000000e+00> : vector<2xf32>
      %30 = vector.multi_reduction <add>, %29, %cst_19 [1] : vector<2x32xf32> to vector<2xf32>
      %31 = vector.shape_cast %30 : vector<2xf32> to vector<2x1xf32>
      %32 = math.log %31 : vector<2x1xf32>
      %33 = vector.broadcast %32 : vector<2x1xf32> to vector<2x32xf32>
      %34 = arith.subf %26, %33 : vector<2x32xf32>
      %35 = arith.mulf %22, %34 : vector<2x32xf32>
      %36 = vector.shape_cast %35 : vector<2x32xf32> to vector<1x2x32xf32>
      %cst_20 = arith.constant dense<0.000000e+00> : vector<1xf32>
      %37 = vector.multi_reduction <add>, %36, %cst_20 [1, 2] : vector<1x2x32xf32> to vector<1xf32>
      %38 = vector.shape_cast %37 : vector<1xf32> to vector<1x1x1xf32>
      %39 = vector.extract %38[0, 0, 0] : f32 from vector<1x1x1xf32>
      %cst_21 = arith.constant 0.000000e+00 : f32
      %40 = arith.subf %cst_21, %39 : f32
      %cst_22 = arith.constant 5.000000e-01 : f32
      %41 = arith.mulf %40, %cst_22 : f32
      %cst_23 = arith.constant 5.000000e-01 : f32
      %42 = vector.broadcast %cst_23 : f32 to vector<2x32xf32>
      %43 = arith.mulf %16, %42 : vector<2x32xf32>
      %cst_24 = arith.constant dense<0xFF800000> : vector<2xf32>
      %44 = vector.multi_reduction <maximumf>, %43, %cst_24 [1] : vector<2x32xf32> to vector<2xf32>
      %45 = vector.shape_cast %44 : vector<2xf32> to vector<2x1xf32>
      %46 = vector.broadcast %45 : vector<2x1xf32> to vector<2x32xf32>
      %47 = arith.subf %43, %46 : vector<2x32xf32>
      %48 = vector.broadcast %45 : vector<2x1xf32> to vector<2x32xf32>
      %49 = arith.subf %43, %48 : vector<2x32xf32>
      %50 = math.exp %49 : vector<2x32xf32>
      %cst_25 = arith.constant dense<0.000000e+00> : vector<2xf32>
      %51 = vector.multi_reduction <add>, %50, %cst_25 [1] : vector<2x32xf32> to vector<2xf32>
      %52 = vector.shape_cast %51 : vector<2xf32> to vector<2x1xf32>
      %53 = math.log %52 : vector<2x1xf32>
      %54 = vector.broadcast %53 : vector<2x1xf32> to vector<2x32xf32>
      %55 = arith.subf %47, %54 : vector<2x32xf32>
      %cst_26 = arith.constant 5.000000e-01 : f32
      %56 = vector.broadcast %cst_26 : f32 to vector<2x32xf32>
      %57 = arith.mulf %14, %56 : vector<2x32xf32>
      %cst_27 = arith.constant dense<0xFF800000> : vector<2xf32>
      %58 = vector.multi_reduction <maximumf>, %57, %cst_27 [1] : vector<2x32xf32> to vector<2xf32>
      %59 = vector.shape_cast %58 : vector<2xf32> to vector<2x1xf32>
      %60 = vector.broadcast %59 : vector<2x1xf32> to vector<2x32xf32>
      %61 = arith.subf %57, %60 : vector<2x32xf32>
      %62 = math.exp %61 : vector<2x32xf32>
      %cst_28 = arith.constant dense<0.000000e+00> : vector<2xf32>
      %63 = vector.multi_reduction <add>, %62, %cst_28 [1] : vector<2x32xf32> to vector<2xf32>
      %64 = vector.shape_cast %63 : vector<2xf32> to vector<2x1xf32>
      %65 = vector.broadcast %59 : vector<2x1xf32> to vector<2x32xf32>
      %66 = arith.subf %57, %65 : vector<2x32xf32>
      %67 = math.log %64 : vector<2x1xf32>
      %68 = vector.broadcast %67 : vector<2x1xf32> to vector<2x32xf32>
      %69 = arith.subf %66, %68 : vector<2x32xf32>
      %70 = tpu.reciprocal %64 {approx = true} : vector<2x1xf32> -> vector<2x1xf32>
      %71 = vector.broadcast %70 : vector<2x1xf32> to vector<2x32xf32>
      %72 = arith.mulf %62, %71 : vector<2x32xf32>
      %73 = arith.subf %69, %55 : vector<2x32xf32>
      %74 = arith.mulf %72, %73 : vector<2x32xf32>
      %75 = vector.shape_cast %74 : vector<2x32xf32> to vector<1x2x32xf32>
      %cst_29 = arith.constant dense<0.000000e+00> : vector<1xf32>
      %76 = vector.multi_reduction <add>, %75, %cst_29 [1, 2] : vector<1x2x32xf32> to vector<1xf32>
      %77 = vector.shape_cast %76 : vector<1xf32> to vector<1x1x1xf32>
      %78 = vector.extract %77[0, 0, 0] : f32 from vector<1x1x1xf32>
      %cst_30 = arith.constant 6.250000e-02 : f32
      %79 = arith.mulf %78, %cst_30 : f32
      %cst_31 = arith.constant 5.000000e-01 : f32
      %80 = arith.mulf %41, %cst_31 : f32
      %cst_32 = arith.constant 5.000000e-01 : f32
      %81 = arith.mulf %79, %cst_32 : f32
      %82 = arith.addf %80, %81 : f32
      %c0_33 = arith.constant 0 : index
      %c0_34 = arith.constant 0 : index
      %83 = memref.load %arg7[%c0_33, %c0_34] : memref<1x1xf32, #tpu.memory_space<smem>>
      memref.store %82, %arg7[%c0_33, %c0_34] : memref<1x1xf32, #tpu.memory_space<smem>>
    } else {
    }
    return
  }
  func.func @transform_0(%arg0: i32) -> (i32, i32) {
    %c0_i32 = arith.constant 0 : i32
    %c0_i32_0 = arith.constant 0 : i32
    return %c0_i32, %arg0 : i32, i32
  }
  func.func @transform_1(%arg0: i32) -> (i32, i32) {
    %c0_i32 = arith.constant 0 : i32
    %c0_i32_0 = arith.constant 0 : i32
    return %arg0, %c0_i32 : i32, i32
  }
  func.func @transform_2(%arg0: i32) -> (i32, i32) {
    %c0_i32 = arith.constant 0 : i32
    %c0_i32_0 = arith.constant 0 : i32
    %c0_i32_1 = arith.constant 0 : i32
    return %c0_i32, %c0_i32_0 : i32, i32
  }
  func.func @transform_3(%arg0: i32) -> (i32, i32) {
    %c0_i32 = arith.constant 0 : i32
    %c0_i32_0 = arith.constant 0 : i32
    %c0_i32_1 = arith.constant 0 : i32
    return %c0_i32, %c0_i32_0 : i32, i32
  }
  func.func @transform_4(%arg0: i32) -> (i32, i32) {
    %c0_i32 = arith.constant 0 : i32
    %c0_i32_0 = arith.constant 0 : i32
    %c0_i32_1 = arith.constant 0 : i32
    return %c0_i32, %c0_i32_0 : i32, i32
  }
  func.func @transform_5(%arg0: i32) -> (i32, i32) {
    %c0_i32 = arith.constant 0 : i32
    %c0_i32_0 = arith.constant 0 : i32
    %c0_i32_1 = arith.constant 0 : i32
    return %c0_i32, %c0_i32_0 : i32, i32
  }
  func.func @transform_6(%arg0: i32) -> (i32, i32) {
    %c0_i32 = arith.constant 0 : i32
    %c0_i32_0 = arith.constant 0 : i32
    %c0_i32_1 = arith.constant 0 : i32
    return %c0_i32, %c0_i32_0 : i32, i32
  }
}

</mosaic_0001>

<llo_original>
// kernel: tpu_custom_call.1
$region0: #{tpu_custom_call.1}
  #allocation0 [shape = 'u32[]', space=smem, size = 0x4, offset = 0x4, fixed_abs, tag = 'smem constant byte address 0x4 - core index']
  #allocation1 [shape = 'u32[144,128]{1,0:T(1,128)}', space=vmem, size = 0x12000, scoped, tag = 'internal scratch']
  #allocation2 [shape = 'f32[2,128]{1,0:T(2,128)}', space=vmem, size = 0x400, scoped, tag = 'scratch operand']
  %s0 = inlined_call_operand.hbm [shape: f32[2,1024], index: 0, kind: input, shape index: {}]
  %s1 = inlined_call_operand.hbm [shape: bf16[1024,128], index: 1, kind: input, shape index: {}]
  %s2 = inlined_call_operand.vmem [shape: f32[1,128], index: 2, kind: input, shape index: {}]
  %s3 = inlined_call_operand.vmem [shape: f32[2,32], index: 3, kind: input, shape index: {}]
  %s4 = inlined_call_operand.vmem [shape: f32[2,32], index: 4, kind: input, shape index: {}]
  %s5 = inlined_call_operand.vmem [shape: s32[2,1], index: 5, kind: input, shape index: {}]
  %s6 = inlined_call_operand.hbm [shape: f32[1,1], index: 6, kind: output, shape index: {}]
  %s7 = sld [smem:[#allocation0]]
  $region50: #{tpu_custom_call.1} parent=0
    _
  %s9 = ssub.s32 1, %s7
  %s10 = scalar_select 0, %s9, %s7
  $region1: #{tpu_custom_call.1} parent=0
    #allocation3 [shape = 'u8[8192]{0}', space=vmem, size = 0x2000, scoped, tag = 'input window, operand 0, single buffered']
    #allocation4 [shape = 's32[1]{0}', space=sflag, size = 0x4, scoped, tag = 'scoped memory for tpu_custom_call.1']
    #allocation5 [shape = 's32[1]{0}', space=sflag, size = 0x4, scoped, tag = 'scoped memory for tpu_custom_call.1']
    #allocation6 [shape = 'u8[262144]{0}', space=vmem, size = 0x40000, scoped, tag = 'input window, operand 1, single buffered']
    #allocation7 [shape = 's32[1]{0}', space=sflag, size = 0x4, scoped, tag = 'scoped memory for tpu_custom_call.1']
    #allocation8 [shape = 'u8[512]{0}', space=smem, size = 0x200, scoped, tag = 'output window, operand 0, single buffered']
    %11 = vsyncpa [#allocation4], 0
    %12 = vsyncpa [#allocation7], 0
    %13 = vsyncpa [#allocation5], 0
    // Predicated region
    $region2: #{tpu_custom_call.1} parent=1 // pred_check
      _
    $region3: #{tpu_custom_call.1} parent=1 // pred_check_branch
      %15 = sbr.rel (0) target = $region5
    $region4: #{tpu_custom_call.1} parent=1 // pred_region
      %s17 = ssub.s32 256, 256
      %18 = vsyncadd [#allocation4], %s17
      %s20 = sshll.u32 [#allocation3], 4
      %s21 = int_to_ptr.vmem [resolvable:$true] %s20
      %23 = dma.hbm_to_vmem [thread:$0]  %s0, 256, %s21, [#allocation4]
    $region5: #{tpu_custom_call.1} parent=1 // pred_fallthru
      _
    // Predicated region
    $region6: #{tpu_custom_call.1} parent=1 // pred_check
      _
    $region7: #{tpu_custom_call.1} parent=1 // pred_check_branch
      %25 = sbr.rel (0) target = $region9
    $region8: #{tpu_custom_call.1} parent=1 // pred_region
      %s27 = ssub.s32 8192, 8192
      %28 = vsyncadd [#allocation7], %s27
      %s29 = sshll.u32 [#allocation6], 4
      %s30 = int_to_ptr.vmem [resolvable:$true] %s29
      %35 = dma.hbm_to_vmem [thread:$0]  %s1, 8192, %s30, [#allocation7], 64, 64, 4
    $region9: #{tpu_custom_call.1} parent=1 // pred_fallthru
      _
    // Predicated region
    $region10: #{tpu_custom_call.1} parent=1 // pred_check
      _
    $region11: #{tpu_custom_call.1} parent=1 // pred_check_branch
      %37 = sbr.rel (0) target = $region13
    $region12: #{tpu_custom_call.1} parent=1 // pred_region
      _
    $region13: #{tpu_custom_call.1} parent=1 // pred_fallthru
      _
    // Predicated region
    $region14: #{tpu_custom_call.1} parent=1 // pred_check
      _
    $region15: #{tpu_custom_call.1} parent=1 // pred_check_branch
      %39 = sbr.rel (0) target = $region17
    $region16: #{tpu_custom_call.1} parent=1 // pred_region
      _
    $region17: #{tpu_custom_call.1} parent=1 // pred_fallthru
      _
    // Predicated region
    $region18: #{tpu_custom_call.1} parent=1 // pred_check
      _
    $region19: #{tpu_custom_call.1} parent=1 // pred_check_branch
      %41 = sbr.rel (0) target = $region21
    $region20: #{tpu_custom_call.1} parent=1 // pred_region
      _
    $region21: #{tpu_custom_call.1} parent=1 // pred_fallthru
      _
    // Predicated region
    $region22: #{tpu_custom_call.1} parent=1 // pred_check
      _
    $region23: #{tpu_custom_call.1} parent=1 // pred_check_branch
      %43 = sbr.rel (0) target = $region25
    $region24: #{tpu_custom_call.1} parent=1 // pred_region
      _
    $region25: #{tpu_custom_call.1} parent=1 // pred_fallthru
      _
    // Predicated region
    $region26: #{tpu_custom_call.1} parent=1 // pred_check
      _
    $region27: #{tpu_custom_call.1} parent=1 // pred_check_branch
      %45 = sbr.rel (0) target = $region29
    $region28: #{tpu_custom_call.1} parent=1 // pred_region
      %46 = dma.done [#allocation4], 256
    $region29: #{tpu_custom_call.1} parent=1 // pred_fallthru
      _
    // Predicated region
    $region30: #{tpu_custom_call.1} parent=1 // pred_check
      _
    $region31: #{tpu_custom_call.1} parent=1 // pred_check_branch
      %48 = sbr.rel (0) target = $region33
    $region32: #{tpu_custom_call.1} parent=1 // pred_region
      %49 = dma.done [#allocation7], 8192
    $region33: #{tpu_custom_call.1} parent=1 // pred_fallthru
      _
    %p51 = scmp.eq.s32.totalorder 0, 0
    // Predicated region
    $region34: #{tpu_custom_call.1} parent=1 // pred_check
      %p52 = pneg %p51
    $region35: #{tpu_custom_call.1} parent=1 // pred_check_branch
      %54 = sbr.rel (%p52) target = $region37
    $region36: #{tpu_custom_call.1} parent=1 // pred_region
      %v55 = vld [vmem:[%s2] sm:$0x1]
      %v57 = vlaneseq
      %v58 = vshrl.u32 %v57, 7
      %v59 = vsub.s32 0, %v58
      %v60 = vrot.slane %v55, %v59
      %62 = vst [vmem:[#allocation2] sm:$0x3] %v60
    $region37: #{tpu_custom_call.1} parent=1 // pred_fallthru
      _
    %v63 = vld [vmem:[#allocation2] sm:$0x3]
    %v64 = vld [vmem:[#allocation3] sm:$0xff]
    %v65 = vld [vmem:[#allocation3 + $0x8] sm:$0xff]
    %v68 = vcombine.high %v64, %v64
    %v70 = vunpack.c.l.s4 1983009808
    %v71 = vunpack.c.0.s8 %v70
    %v72 = vlaneseq
    %v73 = vshrl.u32 %v72, 7
    %v74 = vsub.s32 %v71, %v73
    %v75 = vrot.slane %v64, %v74
    %v77 = vunpack.c.l.s4 1983009808
    %v78 = vunpack.c.0.s8 %v77
    %v79 = vlaneseq
    %v80 = vshrl.u32 %v79, 7
    %v81 = vsub.s32 %v78, %v80
    %v82 = vrot.slane %v68, %v81
    %v83 = vcombine.high %v75, %v75
    %v84 = vcombine.high %v82, %v82
    %v85 = vcombine.high %v65, %v65
    %v87 = vunpack.c.l.s4 1983009808
    %v88 = vunpack.c.0.s8 %v87
    %v89 = vlaneseq
    %v90 = vshrl.u32 %v89, 7
    %v91 = vsub.s32 %v88, %v90
    %v92 = vrot.slane %v65, %v91
    %v94 = vunpack.c.l.s4 1983009808
    %v95 = vunpack.c.0.s8 %v94
    %v96 = vlaneseq
    %v97 = vshrl.u32 %v96, 7
    %v98 = vsub.s32 %v95, %v97
    %v99 = vrot.slane %v85, %v98
    %v100 = vcombine.high %v92, %v92
    %v101 = vcombine.high %v99, %v99
    %v110 = vpack.c.bf16 %v75, %v75
    %v111 = vpack.c.bf16 %v83, %v83
    %v112 = vpack.c.bf16 %v82, %v82
    %v113 = vpack.c.bf16 %v84, %v84
    %v114 = vpack.c.bf16 %v92, %v92
    %v115 = vpack.c.bf16 %v100, %v100
    %v116 = vpack.c.bf16 %v99, %v99
    %v117 = vpack.c.bf16 %v101, %v101
    %v118 = vld [vmem:[#allocation6] sm:$0xf]
    %v119 = vld [vmem:[#allocation6 + $0x4] sm:$0xf]
    %v120 = vld [vmem:[#allocation6 + $0x8] sm:$0xf]
    %v121 = vld [vmem:[#allocation6 + $0xc] sm:$0xf]
    %v122 = vld [vmem:[#allocation6 + $0x10] sm:$0xf]
    %v123 = vld [vmem:[#allocation6 + $0x14] sm:$0xf]
    %v124 = vld [vmem:[#allocation6 + $0x18] sm:$0xf]
    %v125 = vld [vmem:[#allocation6 + $0x1c] sm:$0xf]
    %v126 = vld [vmem:[#allocation6 + $0x20] sm:$0xf]
    %v127 = vld [vmem:[#allocation6 + $0x24] sm:$0xf]
    %v128 = vld [vmem:[#allocation6 + $0x28] sm:$0xf]
    %v129 = vld [vmem:[#allocation6 + $0x2c] sm:$0xf]
    %v130 = vld [vmem:[#allocation6 + $0x30] sm:$0xf]
    %v131 = vld [vmem:[#allocation6 + $0x34] sm:$0xf]
    %v132 = vld [vmem:[#allocation6 + $0x38] sm:$0xf]
    %v133 = vld [vmem:[#allocation6 + $0x3c] sm:$0xf]
    %v134 = vld [vmem:[#allocation6 + $0x40] sm:$0xf]
    %v135 = vld [vmem:[#allocation6 + $0x44] sm:$0xf]
    %v136 = vld [vmem:[#allocation6 + $0x48] sm:$0xf]
    %v137 = vld [vmem:[#allocation6 + $0x4c] sm:$0xf]
    %v138 = vld [vmem:[#allocation6 + $0x50] sm:$0xf]
    %v139 = vld [vmem:[#allocation6 + $0x54] sm:$0xf]
    %v140 = vld [vmem:[#allocation6 + $0x58] sm:$0xf]
    %v141 = vld [vmem:[#allocation6 + $0x5c] sm:$0xf]
    %v142 = vld [vmem:[#allocation6 + $0x60] sm:$0xf]
    %v143 = vld [vmem:[#allocation6 + $0x64] sm:$0xf]
    %v144 = vld [vmem:[#allocation6 + $0x68] sm:$0xf]
    %v145 = vld [vmem:[#allocation6 + $0x6c] sm:$0xf]
    %v146 = vld [vmem:[#allocation6 + $0x70] sm:$0xf]
    %v147 = vld [vmem:[#allocation6 + $0x74] sm:$0xf]
    %v148 = vld [vmem:[#allocation6 + $0x78] sm:$0xf]
    %v149 = vld [vmem:[#allocation6 + $0x7c] sm:$0xf]
    %v150 = vld [vmem:[#allocation6 + $0x80] sm:$0xf]
    %v151 = vld [vmem:[#allocation6 + $0x84] sm:$0xf]
    %v152 = vld [vmem:[#allocation6 + $0x88] sm:$0xf]
    %v153 = vld [vmem:[#allocation6 + $0x8c] sm:$0xf]
    %v154 = vld [vmem:[#allocation6 + $0x90] sm:$0xf]
    %v155 = vld [vmem:[#allocation6 + $0x94] sm:$0xf]
    %v156 = vld [vmem:[#allocation6 + $0x98] sm:$0xf]
    %v157 = vld [vmem:[#allocation6 + $0x9c] sm:$0xf]
    %v158 = vld [vmem:[#allocation6 + $0xa0] sm:$0xf]
    %v159 = vld [vmem:[#allocation6 + $0xa4] sm:$0xf]
    %v160 = vld [vmem:[#allocation6 + $0xa8] sm:$0xf]
    %v161 = vld [vmem:[#allocation6 + $0xac] sm:$0xf]
    %v162 = vld [vmem:[#allocation6 + $0xb0] sm:$0xf]
    %v163 = vld [vmem:[#allocation6 + $0xb4] sm:$0xf]
    %v164 = vld [vmem:[#allocation6 + $0xb8] sm:$0xf]
    %v165 = vld [vmem:[#allocation6 + $0xbc] sm:$0xf]
    %v166 = vld [vmem:[#allocation6 + $0xc0] sm:$0xf]
    %v167 = vld [vmem:[#allocation6 + $0xc4] sm:$0xf]
    %v168 = vld [vmem:[#allocation6 + $0xc8] sm:$0xf]
    %v169 = vld [vmem:[#allocation6 + $0xcc] sm:$0xf]
    %v170 = vld [vmem:[#allocation6 + $0xd0] sm:$0xf]
    %v171 = vld [vmem:[#allocation6 + $0xd4] sm:$0xf]
    %v172 = vld [vmem:[#allocation6 + $0xd8] sm:$0xf]
    %v173 = vld [vmem:[#allocation6 + $0xdc] sm:$0xf]
    %v174 = vld [vmem:[#allocation6 + $0xe0] sm:$0xf]
    %v175 = vld [vmem:[#allocation6 + $0xe4] sm:$0xf]
    %v176 = vld [vmem:[#allocation6 + $0xe8] sm:$0xf]
    %v177 = vld [vmem:[#allocation6 + $0xec] sm:$0xf]
    %v178 = vld [vmem:[#allocation6 + $0xf0] sm:$0xf]
    %v179 = vld [vmem:[#allocation6 + $0xf4] sm:$0xf]
    %v180 = vld [vmem:[#allocation6 + $0xf8] sm:$0xf]
    %v181 = vld [vmem:[#allocation6 + $0xfc] sm:$0xf]
    %v182 = vld [vmem:[#allocation6 + $0x100] sm:$0xf]
    %v183 = vld [vmem:[#allocation6 + $0x104] sm:$0xf]
    %v184 = vld [vmem:[#allocation6 + $0x108] sm:$0xf]
    %v185 = vld [vmem:[#allocation6 + $0x10c] sm:$0xf]
    %v186 = vld [vmem:[#allocation6 + $0x110] sm:$0xf]
    %v187 = vld [vmem:[#allocation6 + $0x114] sm:$0xf]
    %v188 = vld [vmem:[#allocation6 + $0x118] sm:$0xf]
    %v189 = vld [vmem:[#allocation6 + $0x11c] sm:$0xf]
    %v190 = vld [vmem:[#allocation6 + $0x120] sm:$0xf]
    %v191 = vld [vmem:[#allocation6 + $0x124] sm:$0xf]
    %v192 = vld [vmem:[#allocation6 + $0x128] sm:$0xf]
    %v193 = vld [vmem:[#allocation6 + $0x12c] sm:$0xf]
    %v194 = vld [vmem:[#allocation6 + $0x130] sm:$0xf]
    %v195 = vld [vmem:[#allocation6 + $0x134] sm:$0xf]
    %v196 = vld [vmem:[#allocation6 + $0x138] sm:$0xf]
    %v197 = vld [vmem:[#allocation6 + $0x13c] sm:$0xf]
    %v198 = vld [vmem:[#allocation6 + $0x140] sm:$0xf]
    %v199 = vld [vmem:[#allocation6 + $0x144] sm:$0xf]
    %v200 = vld [vmem:[#allocation6 + $0x148] sm:$0xf]
    %v201 = vld [vmem:[#allocation6 + $0x14c] sm:$0xf]
    %v202 = vld [vmem:[#allocation6 + $0x150] sm:$0xf]
    %v203 = vld [vmem:[#allocation6 + $0x154] sm:$0xf]
    %v204 = vld [vmem:[#allocation6 + $0x158] sm:$0xf]
    %v205 = vld [vmem:[#allocation6 + $0x15c] sm:$0xf]
    %v206 = vld [vmem:[#allocation6 + $0x160] sm:$0xf]
    %v207 = vld [vmem:[#allocation6 + $0x164] sm:$0xf]
    %v208 = vld [vmem:[#allocation6 + $0x168] sm:$0xf]
    %v209 = vld [vmem:[#allocation6 + $0x16c] sm:$0xf]
    %v210 = vld [vmem:[#allocation6 + $0x170] sm:$0xf]
    %v211 = vld [vmem:[#allocation6 + $0x174] sm:$0xf]
    %v212 = vld [vmem:[#allocation6 + $0x178] sm:$0xf]
    %v213 = vld [vmem:[#allocation6 + $0x17c] sm:$0xf]
    %v214 = vld [vmem:[#allocation6 + $0x180] sm:$0xf]
    %v215 = vld [vmem:[#allocation6 + $0x184] sm:$0xf]
    %v216 = vld [vmem:[#allocation6 + $0x188] sm:$0xf]
    %v217 = vld [vmem:[#allocation6 + $0x18c] sm:$0xf]
    %v218 = vld [vmem:[#allocation6 + $0x190] sm:$0xf]
    %v219 = vld [vmem:[#allocation6 + $0x194] sm:$0xf]
    %v220 = vld [vmem:[#allocation6 + $0x198] sm:$0xf]
    %v221 = vld [vmem:[#allocation6 + $0x19c] sm:$0xf]
    %v222 = vld [vmem:[#allocation6 + $0x1a0] sm:$0xf]
    %v223 = vld [vmem:[#allocation6 + $0x1a4] sm:$0xf]
    %v224 = vld [vmem:[#allocation6 + $0x1a8] sm:$0xf]
    %v225 = vld [vmem:[#allocation6 + $0x1ac] sm:$0xf]
    %v226 = vld [vmem:[#allocation6 + $0x1b0] sm:$0xf]
    %v227 = vld [vmem:[#allocation6 + $0x1b4] sm:$0xf]
    %v228 = vld [vmem:[#allocation6 + $0x1b8] sm:$0xf]
    %v229 = vld [vmem:[#allocation6 + $0x1bc] sm:$0xf]
    %v230 = vld [vmem:[#allocation6 + $0x1c0] sm:$0xf]
    %v231 = vld [vmem:[#allocation6 + $0x1c4] sm:$0xf]
    %v232 = vld [vmem:[#allocation6 + $0x1c8] sm:$0xf]
    %v233 = vld [vmem:[#allocation6 + $0x1cc] sm:$0xf]
    %v234 = vld [vmem:[#allocation6 + $0x1d0] sm:$0xf]
    %v235 = vld [vmem:[#allocation6 + $0x1d4] sm:$0xf]
    %v236 = vld [vmem:[#allocation6 + $0x1d8] sm:$0xf]
    %v237 = vld [vmem:[#allocation6 + $0x1dc] sm:$0xf]
    %v238 = vld [vmem:[#allocation6 + $0x1e0] sm:$0xf]
    %v239 = vld [vmem:[#allocation6 + $0x1e4] sm:$0xf]
    %v240 = vld [vmem:[#allocation6 + $0x1e8] sm:$0xf]
    %v241 = vld [vmem:[#allocation6 + $0x1ec] sm:$0xf]
    %v242 = vld [vmem:[#allocation6 + $0x1f0] sm:$0xf]
    %v243 = vld [vmem:[#allocation6 + $0x1f4] sm:$0xf]
    %v244 = vld [vmem:[#allocation6 + $0x1f8] sm:$0xf]
    %v245 = vld [vmem:[#allocation6 + $0x1fc] sm:$0xf]
    %v374 = vunpack.c.l.b16 %v118
    %v375 = vunpack.c.l.b16 %v119
    %v376 = vunpack.c.l.b16 %v120
    %v377 = vunpack.c.l.b16 %v121
    %v378 = vunpack.c.l.b16 %v122
    %v379 = vunpack.c.l.b16 %v123
    %v380 = vunpack.c.l.b16 %v124
    %v381 = vunpack.c.l.b16 %v125
    %v382 = vunpack.c.l.b16 %v126
    %v383 = vunpack.c.l.b16 %v127
    %v384 = vunpack.c.l.b16 %v128
    %v385 = vunpack.c.l.b16 %v129
    %v386 = vunpack.c.l.b16 %v130
    %v387 = vunpack.c.l.b16 %v131
    %v388 = vunpack.c.l.b16 %v132
    %v389 = vunpack.c.l.b16 %v133
    %v390 = vunpack.c.l.b16 %v134
    %v391 = vunpack.c.l.b16 %v135
    %v392 = vunpack.c.l.b16 %v136
    %v393 = vunpack.c.l.b16 %v137
    %v394 = vunpack.c.l.b16 %v138
    %v395 = vunpack.c.l.b16 %v139
    %v396 = vunpack.c.l.b16 %v140
    %v397 = vunpack.c.l.b16 %v141
    %v398 = vunpack.c.l.b16 %v142
    %v399 = vunpack.c.l.b16 %v143
    %v400 = vunpack.c.l.b16 %v144
    %v401 = vunpack.c.l.b16 %v145
    %v402 = vunpack.c.l.b16 %v146
    %v403 = vunpack.c.l.b16 %v147
    %v404 = vunpack.c.l.b16 %v148
    %v405 = vunpack.c.l.b16 %v149
    %v406 = vunpack.c.l.b16 %v150
    %v407 = vunpack.c.l.b16 %v151
    %v408 = vunpack.c.l.b16 %v152
    %v409 = vunpack.c.l.b16 %v153
    %v410 = vunpack.c.l.b16 %v154
    %v411 = vunpack.c.l.b16 %v155
    %v412 = vunpack.c.l.b16 %v156
    %v413 = vunpack.c.l.b16 %v157
    %v414 = vunpack.c.l.b16 %v158
    %v415 = vunpack.c.l.b16 %v159
    %v416 = vunpack.c.l.b16 %v160
    %v417 = vunpack.c.l.b16 %v161
    %v418 = vunpack.c.l.b16 %v162
    %v419 = vunpack.c.l.b16 %v163
    %v420 = vunpack.c.l.b16 %v164
    %v421 = vunpack.c.l.b16 %v165
    %v422 = vunpack.c.l.b16 %v166
    %v423 = vunpack.c.l.b16 %v167
    %v424 = vunpack.c.l.b16 %v168
    %v425 = vunpack.c.l.b16 %v169
    %v426 = vunpack.c.l.b16 %v170
    %v427 = vunpack.c.l.b16 %v171
    %v428 = vunpack.c.l.b16 %v172
    %v429 = vunpack.c.l.b16 %v173
    %v430 = vunpack.c.l.b16 %v174
    %v431 = vunpack.c.l.b16 %v175
    %v432 = vunpack.c.l.b16 %v176
    %v433 = vunpack.c.l.b16 %v177
    %v434 = vunpack.c.l.b16 %v178
    %v435 = vunpack.c.l.b16 %v179
    %v436 = vunpack.c.l.b16 %v180
    %v437 = vunpack.c.l.b16 %v181
    %v438 = vunpack.c.l.b16 %v182
    %v439 = vunpack.c.l.b16 %v183
    %v440 = vunpack.c.l.b16 %v184
    %v441 = vunpack.c.l.b16 %v185
    %v442 = vunpack.c.l.b16 %v186
    %v443 = vunpack.c.l.b16 %v187
    %v444 = vunpack.c.l.b16 %v188
    %v445 = vunpack.c.l.b16 %v189
    %v446 = vunpack.c.l.b16 %v190
    %v447 = vunpack.c.l.b16 %v191
    %v448 = vunpack.c.l.b16 %v192
    %v449 = vunpack.c.l.b16 %v193
    %v450 = vunpack.c.l.b16 %v194
    %v451 = vunpack.c.l.b16 %v195
    %v452 = vunpack.c.l.b16 %v196
    %v453 = vunpack.c.l.b16 %v197
    %v454 = vunpack.c.l.b16 %v198
    %v455 = vunpack.c.l.b16 %v199
    %v456 = vunpack.c.l.b16 %v200
    %v457 = vunpack.c.l.b16 %v201
    %v458 = vunpack.c.l.b16 %v202
    %v459 = vunpack.c.l.b16 %v203
    %v460 = vunpack.c.l.b16 %v204
    %v461 = vunpack.c.l.b16 %v205
    %v462 = vunpack.c.l.b16 %v206
    %v463 = vunpack.c.l.b16 %v207
    %v464 = vunpack.c.l.b16 %v208
    %v465 = vunpack.c.l.b16 %v209
    %v466 = vunpack.c.l.b16 %v210
    %v467 = vunpack.c.l.b16 %v211
    %v468 = vunpack.c.l.b16 %v212
    %v469 = vunpack.c.l.b16 %v213
    %v470 = vunpack.c.l.b16 %v214
    %v471 = vunpack.c.l.b16 %v215
    %v472 = vunpack.c.l.b16 %v216
    %v473 = vunpack.c.l.b16 %v217
    %v474 = vunpack.c.l.b16 %v218
    %v475 = vunpack.c.l.b16 %v219
    %v476 = vunpack.c.l.b16 %v220
    %v477 = vunpack.c.l.b16 %v221
    %v478 = vunpack.c.l.b16 %v222
    %v479 = vunpack.c.l.b16 %v223
    %v480 = vunpack.c.l.b16 %v224
    %v481 = vunpack.c.l.b16 %v225
    %v482 = vunpack.c.l.b16 %v226
    %v483 = vunpack.c.l.b16 %v227
    %v484 = vunpack.c.l.b16 %v228
    %v485 = vunpack.c.l.b16 %v229
    %v486 = vunpack.c.l.b16 %v230
    %v487 = vunpack.c.l.b16 %v231
    %v488 = vunpack.c.l.b16 %v232
    %v489 = vunpack.c.l.b16 %v233
    %v490 = vunpack.c.l.b16 %v234
    %v491 = vunpack.c.l.b16 %v235
    %v492 = vunpack.c.l.b16 %v236
    %v493 = vunpack.c.l.b16 %v237
    %v494 = vunpack.c.l.b16 %v238
    %v495 = vunpack.c.l.b16 %v239
    %v496 = vunpack.c.l.b16 %v240
    %v497 = vunpack.c.l.b16 %v241
    %v498 = vunpack.c.l.b16 %v242
    %v499 = vunpack.c.l.b16 %v243
    %v500 = vunpack.c.l.b16 %v244
    %v501 = vunpack.c.l.b16 %v245
    %v502 = vpack.c.b16 %v375, %v374
    %v503 = vpack.c.b16 %v377, %v376
    %v504 = vpack.c.b16 %v379, %v378
    %v505 = vpack.c.b16 %v381, %v380
    %v506 = vpack.c.b16 %v383, %v382
    %v507 = vpack.c.b16 %v385, %v384
    %v508 = vpack.c.b16 %v387, %v386
    %v509 = vpack.c.b16 %v389, %v388
    %v510 = vpack.c.b16 %v391, %v390
    %v511 = vpack.c.b16 %v393, %v392
    %v512 = vpack.c.b16 %v395, %v394
    %v513 = vpack.c.b16 %v397, %v396
    %v514 = vpack.c.b16 %v399, %v398
    %v515 = vpack.c.b16 %v401, %v400
    %v516 = vpack.c.b16 %v403, %v402
    %v517 = vpack.c.b16 %v405, %v404
    %v518 = vpack.c.b16 %v407, %v406
    %v519 = vpack.c.b16 %v409, %v408
    %v520 = vpack.c.b16 %v411, %v410
    %v521 = vpack.c.b16 %v413, %v412
    %v522 = vpack.c.b16 %v415, %v414
    %v523 = vpack.c.b16 %v417, %v416
    %v524 = vpack.c.b16 %v419, %v418
    %v525 = vpack.c.b16 %v421, %v420
    %v526 = vpack.c.b16 %v423, %v422
    %v527 = vpack.c.b16 %v425, %v424
    %v528 = vpack.c.b16 %v427, %v426
    %v529 = vpack.c.b16 %v429, %v428
    %v530 = vpack.c.b16 %v431, %v430
    %v531 = vpack.c.b16 %v433, %v432
    %v532 = vpack.c.b16 %v435, %v434
    %v533 = vpack.c.b16 %v437, %v436
    %v534 = vpack.c.b16 %v439, %v438
    %v535 = vpack.c.b16 %v441, %v440
    %v536 = vpack.c.b16 %v443, %v442
    %v537 = vpack.c.b16 %v445, %v444
    %v538 = vpack.c.b16 %v447, %v446
    %v539 = vpack.c.b16 %v449, %v448
    %v540 = vpack.c.b16 %v451, %v450
    %v541 = vpack.c.b16 %v453, %v452
    %v542 = vpack.c.b16 %v455, %v454
    %v543 = vpack.c.b16 %v457, %v456
    %v544 = vpack.c.b16 %v459, %v458
    %v545 = vpack.c.b16 %v461, %v460
    %v546 = vpack.c.b16 %v463, %v462
    %v547 = vpack.c.b16 %v465, %v464
    %v548 = vpack.c.b16 %v467, %v466
    %v549 = vpack.c.b16 %v469, %v468
    %v550 = vpack.c.b16 %v471, %v470
    %v551 = vpack.c.b16 %v473, %v472
    %v552 = vpack.c.b16 %v475, %v474
    %v553 = vpack.c.b16 %v477, %v476
    %v554 = vpack.c.b16 %v479, %v478
    %v555 = vpack.c.b16 %v481, %v480
    %v556 = vpack.c.b16 %v483, %v482
    %v557 = vpack.c.b16 %v485, %v484
    %v558 = vpack.c.b16 %v487, %v486
    %v559 = vpack.c.b16 %v489, %v488
    %v560 = vpack.c.b16 %v491, %v490
    %v561 = vpack.c.b16 %v493, %v492
    %v562 = vpack.c.b16 %v495, %v494
    %v563 = vpack.c.b16 %v497, %v496
    %v564 = vpack.c.b16 %v499, %v498
    %v565 = vpack.c.b16 %v501, %v500
    %630 = vmatprep.subr.bf16.mxu0 0
    %631 = vmatpush1.bf16.msra.mxu0 %v502
    %632 = vmatprep.subr.bf16.mxu0 0
    %633 = vmatpush1.bf16.msra.mxu0 %v503
    %634 = vmatprep.subr.bf16.mxu0 0
    %635 = vmatpush1.bf16.msra.mxu0 %v504
    %636 = vmatprep.subr.bf16.mxu0 0
    %637 = vmatpush1.bf16.msra.mxu0 %v505
    %638 = vmatprep.subr.bf16.mxu0 0
    %639 = vmatpush1.bf16.msra.mxu0 %v506
    %640 = vmatprep.subr.bf16.mxu0 0
    %641 = vmatpush1.bf16.msra.mxu0 %v507
    %642 = vmatprep.subr.bf16.mxu0 0
    %643 = vmatpush1.bf16.msra.mxu0 %v508
    %644 = vmatprep.subr.bf16.mxu0 0
    %645 = vmatpush1.bf16.msra.mxu0 %v509
    %646 = vmatprep.subr.bf16.mxu0 0
    %647 = vmatpush1.bf16.msra.mxu0 %v510
    %648 = vmatprep.subr.bf16.mxu0 0
    %649 = vmatpush1.bf16.msra.mxu0 %v511
    %650 = vmatprep.subr.bf16.mxu0 0
    %651 = vmatpush1.bf16.msra.mxu0 %v512
    %652 = vmatprep.subr.bf16.mxu0 0
    %653 = vmatpush1.bf16.msra.mxu0 %v513
    %654 = vmatprep.subr.bf16.mxu0 0
    %655 = vmatpush1.bf16.msra.mxu0 %v514
    %656 = vmatprep.subr.bf16.mxu0 0
    %657 = vmatpush1.bf16.msra.mxu0 %v515
    %658 = vmatprep.subr.bf16.mxu0 0
    %659 = vmatpush1.bf16.msra.mxu0 %v516
    %660 = vmatprep.subr.bf16.mxu0 0
    %661 = vmatpush1.bf16.msra.mxu0 %v517
    %662 = vmatprep.mubr.bf16.mxu0 %v111
    %663 = vmatmul.mubr.bf16.gmra.mrb[0].mxu0 %v110
    %v664 = vpop.f32.mrb[0].mxu0
    %v665 = vadd.f32 0.0, %v664
    %v666 = vpop.f32.mrb[0].mxu0
    %v667 = vpop.f32.mrb[0].mxu0
    %v668 = vpop.f32.mrb[0].mxu0
    %669 = vdwg.mxu0
    %670 = vmatprep.subr.bf16.mxu0 0
    %671 = vmatpush1.bf16.msra.mxu0 %v518
    %672 = vmatprep.subr.bf16.mxu0 0
    %673 = vmatpush1.bf16.msra.mxu0 %v519
    %674 = vmatprep.subr.bf16.mxu0 0
    %675 = vmatpush1.bf16.msra.mxu0 %v520
    %676 = vmatprep.subr.bf16.mxu0 0
    %677 = vmatpush1.bf16.msra.mxu0 %v521
    %678 = vmatprep.subr.bf16.mxu0 0
    %679 = vmatpush1.bf16.msra.mxu0 %v522
    %680 = vmatprep.subr.bf16.mxu0 0
    %681 = vmatpush1.bf16.msra.mxu0 %v523
    %682 = vmatprep.subr.bf16.mxu0 0
    %683 = vmatpush1.bf16.msra.mxu0 %v524
    %684 = vmatprep.subr.bf16.mxu0 0
    %685 = vmatpush1.bf16.msra.mxu0 %v525
    %686 = vmatprep.subr.bf16.mxu0 0
    %687 = vmatpush1.bf16.msra.mxu0 %v526
    %688 = vmatprep.subr.bf16.mxu0 0
    %689 = vmatpush1.bf16.msra.mxu0 %v527
    %690 = vmatprep.subr.bf16.mxu0 0
    %691 = vmatpush1.bf16.msra.mxu0 %v528
    %692 = vmatprep.subr.bf16.mxu0 0
    %693 = vmatpush1.bf16.msra.mxu0 %v529
    %694 = vmatprep.subr.bf16.mxu0 0
    %695 = vmatpush1.bf16.msra.mxu0 %v530
    %696 = vmatprep.subr.bf16.mxu0 0
    %697 = vmatpush1.bf16.msra.mxu0 %v531
    %698 = vmatprep.subr.bf16.mxu0 0
    %699 = vmatpush1.bf16.msra.mxu0 %v532
    %700 = vmatprep.subr.bf16.mxu0 0
    %701 = vmatpush1.bf16.msra.mxu0 %v533
    %702 = vmatprep.mubr.bf16.mxu0 %v113
    %703 = vmatmul.mubr.bf16.gmra.mrb[0].mxu0 %v112
    %v704 = vpop.f32.mrb[0].mxu0
    %v705 = vadd.f32 %v665, %v704
    %v706 = vpop.f32.mrb[0].mxu0
    %v707 = vpop.f32.mrb[0].mxu0
    %v708 = vpop.f32.mrb[0].mxu0
    %709 = vdwg.mxu0
    %710 = vmatprep.subr.bf16.mxu0 0
    %711 = vmatpush1.bf16.msra.mxu0 %v534
    %712 = vmatprep.subr.bf16.mxu0 0
    %713 = vmatpush1.bf16.msra.mxu0 %v535
    %714 = vmatprep.subr.bf16.mxu0 0
    %715 = vmatpush1.bf16.msra.mxu0 %v536
    %716 = vmatprep.subr.bf16.mxu0 0
    %717 = vmatpush1.bf16.msra.mxu0 %v537
    %718 = vmatprep.subr.bf16.mxu0 0
    %719 = vmatpush1.bf16.msra.mxu0 %v538
    %720 = vmatprep.subr.bf16.mxu0 0
    %721 = vmatpush1.bf16.msra.mxu0 %v539
    %722 = vmatprep.subr.bf16.mxu0 0
    %723 = vmatpush1.bf16.msra.mxu0 %v540
    %724 = vmatprep.subr.bf16.mxu0 0
    %725 = vmatpush1.bf16.msra.mxu0 %v541
    %726 = vmatprep.subr.bf16.mxu0 0
    %727 = vmatpush1.bf16.msra.mxu0 %v542
    %728 = vmatprep.subr.bf16.mxu0 0
    %729 = vmatpush1.bf16.msra.mxu0 %v543
    %730 = vmatprep.subr.bf16.mxu0 0
    %731 = vmatpush1.bf16.msra.mxu0 %v544
    %732 = vmatprep.subr.bf16.mxu0 0
    %733 = vmatpush1.bf16.msra.mxu0 %v545
    %734 = vmatprep.subr.bf16.mxu0 0
    %735 = vmatpush1.bf16.msra.mxu0 %v546
    %736 = vmatprep.subr.bf16.mxu0 0
    %737 = vmatpush1.bf16.msra.mxu0 %v547
    %738 = vmatprep.subr.bf16.mxu0 0
    %739 = vmatpush1.bf16.msra.mxu0 %v548
    %740 = vmatprep.subr.bf16.mxu0 0
    %741 = vmatpush1.bf16.msra.mxu0 %v549
    %742 = vmatprep.mubr.bf16.mxu0 %v115
    %743 = vmatmul.mubr.bf16.gmra.mrb[0].mxu0 %v114
    %v744 = vpop.f32.mrb[0].mxu0
    %v745 = vadd.f32 %v705, %v744
    %v746 = vpop.f32.mrb[0].mxu0
    %v747 = vpop.f32.mrb[0].mxu0
    %v748 = vpop.f32.mrb[0].mxu0
    %749 = vdwg.mxu0
    %750 = vmatprep.subr.bf16.mxu0 0
    %751 = vmatpush1.bf16.msra.mxu0 %v550
    %752 = vmatprep.subr.bf16.mxu0 0
    %753 = vmatpush1.bf16.msra.mxu0 %v551
    %754 = vmatprep.subr.bf16.mxu0 0
    %755 = vmatpush1.bf16.msra.mxu0 %v552
    %756 = vmatprep.subr.bf16.mxu0 0
    %757 = vmatpush1.bf16.msra.mxu0 %v553
    %758 = vmatprep.subr.bf16.mxu0 0
    %759 = vmatpush1.bf16.msra.mxu0 %v554
    %760 = vmatprep.subr.bf16.mxu0 0
    %761 = vmatpush1.bf16.msra.mxu0 %v555
    %762 = vmatprep.subr.bf16.mxu0 0
    %763 = vmatpush1.bf16.msra.mxu0 %v556
    %764 = vmatprep.subr.bf16.mxu0 0
    %765 = vmatpush1.bf16.msra.mxu0 %v557
    %766 = vmatprep.subr.bf16.mxu0 0
    %767 = vmatpush1.bf16.msra.mxu0 %v558
    %768 = vmatprep.subr.bf16.mxu0 0
    %769 = vmatpush1.bf16.msra.mxu0 %v559
    %770 = vmatprep.subr.bf16.mxu0 0
    %771 = vmatpush1.bf16.msra.mxu0 %v560
    %772 = vmatprep.subr.bf16.mxu0 0
    %773 = vmatpush1.bf16.msra.mxu0 %v561
    %774 = vmatprep.subr.bf16.mxu0 0
    %775 = vmatpush1.bf16.msra.mxu0 %v562
    %776 = vmatprep.subr.bf16.mxu0 0
    %777 = vmatpush1.bf16.msra.mxu0 %v563
    %778 = vmatprep.subr.bf16.mxu0 0
    %779 = vmatpush1.bf16.msra.mxu0 %v564
    %780 = vmatprep.subr.bf16.mxu0 0
    %781 = vmatpush1.bf16.msra.mxu0 %v565
    %782 = vmatprep.mubr.bf16.mxu0 %v117
    %783 = vmatmul.mubr.bf16.gmra.mrb[0].mxu0 %v116
    %v784 = vpop.f32.mrb[0].mxu0
    %v785 = vadd.f32 %v745, %v784
    %v786 = vpop.f32.mrb[0].mxu0
    %v787 = vpop.f32.mrb[0].mxu0
    %v788 = vpop.f32.mrb[0].mxu0
    %789 = vdwg.mxu0
    %v790 = vadd.f32 %v63, %v785
    %791 = vst [vmem:[#allocation2] sm:$0x3] %v790
    // Predicated region
    $region38: #{tpu_custom_call.1} parent=1 // pred_check
      %p792 = pneg %p51
    $region39: #{tpu_custom_call.1} parent=1 // pred_check_branch
      %794 = sbr.rel (%p792) target = $region41
    $region40: #{tpu_custom_call.1} parent=1 // pred_region
      %v795 = vld [vmem:[#allocation2] sm:$0x3]
      %v796 = vld [vmem:[%s3] sm:$0x3]
      %v797 = vld [vmem:[%s4] sm:$0x3]
      %v798 = vld [vmem:[%s5] sm:$0x3]
      %v799 = vlaneseq
      %v800 = vand.u32 %v799, 127
      %801 = vset.pattern.permute.xlu0 0
      %802 = vperm.xlu0 %801, %v798
      %v803 = vpop.permute.xlu0 %802
      %vm804 = vcmp.eq.s32.totalorder %v800, %v803
      %v805 = vsel %vm804, 1, 0
      %v806 = vcvt.s32.f32 %v805
      %vm807 = vcmask 254976
      %v808 = vsel %vm807, %v796, -inf
      %809 = vmax.xlane.f32.xlu0 %v808
      %v810 = vpop.xlane.xlu0 %809
      %v811 = vsub.f32 %v796, %v810
      %v812 = vmul.f32 %v811, 1.442695
      %v813 = vpow.pop %v812
      %v814 = vsel %vm807, %v813, 0.0
      %815 = vadd.xlane.f32.xlu0 %v814
      %v816 = vpop.xlane.xlu0 %815
      %v817 = vlog2.pop %v816
      %v818 = vmul.f32 %v817, 0.6931472
      %v819 = vsub.f32 %v811, %v818
      %v820 = vmul.f32 %v806, %v819
      %v821 = vsel %vm807, %v820, 0.0
      %822 = vadd.xlane.f32.xlu0 %v821
      %v823 = vpop.xlane.xlu0 %822
      %v824 = vrot.slane %v823, 4
      %v825 = vadd.f32 %v823, %v824
      %v826 = vrot.slane %v825, 2
      %v827 = vadd.f32 %v825, %v826
      %v828 = vrot.slane %v827, 1
      %v829 = vadd.f32 %v827, %v828
      %s830 = vtos %v829
      %s831 = ssub.f32 0.0, %s830
      %s832 = smul.f32 %s831, 0.5
      %v833 = vmul.f32 %v797, 0.5
      %v834 = vsel %vm807, %v833, -inf
      %835 = vmax.xlane.f32.xlu0 %v834
      %v836 = vpop.xlane.xlu0 %835
      %v837 = vsub.f32 %v833, %v836
      %v838 = vmul.f32 %v837, 1.442695
      %v839 = vpow.pop %v838
      %v840 = vsel %vm807, %v839, 0.0
      %841 = vadd.xlane.f32.xlu0 %v840
      %v842 = vpop.xlane.xlu0 %841
      %v843 = vlog2.pop %v842
      %v844 = vmul.f32 %v843, 0.6931472
      %v845 = vsub.f32 %v837, %v844
      %v846 = vmul.f32 %v795, 0.5
      %v847 = vsel %vm807, %v846, -inf
      %848 = vmax.xlane.f32.xlu0 %v847
      %v849 = vpop.xlane.xlu0 %848
      %v850 = vsub.f32 %v846, %v849
      %v851 = vmul.f32 %v850, 1.442695
      %v852 = vpow.pop %v851
      %v853 = vsel %vm807, %v852, 0.0
      %854 = vadd.xlane.f32.xlu0 %v853
      %v855 = vpop.xlane.xlu0 %854
      %v856 = vlog2.pop %v855
      %v857 = vmul.f32 %v856, 0.6931472
      %v858 = vsub.f32 %v850, %v857
      %v859 = vrcp.pop %v855
      %v860 = vmul.f32 %v852, %v859
      %v861 = vsub.f32 %v858, %v845
      %v862 = vmul.f32 %v860, %v861
      %v863 = vsel %vm807, %v862, 0.0
      %864 = vadd.xlane.f32.xlu0 %v863
      %v865 = vpop.xlane.xlu0 %864
      %v866 = vrot.slane %v865, 4
      %v867 = vadd.f32 %v865, %v866
      %v868 = vrot.slane %v867, 2
      %v869 = vadd.f32 %v867, %v868
      %v870 = vrot.slane %v869, 1
      %v871 = vadd.f32 %v869, %v870
      %s872 = vtos %v871
      %s873 = smul.f32 %s872, 0.0625
      %s874 = smul.f32 %s832, 0.5
      %s875 = smul.f32 %s873, 0.5
      %s876 = sadd.f32 %s874, %s875
      %s877 = scalar_lea.smem [#allocation8], 0
      %878 = sst [smem:[%s877]] %s876
    $region41: #{tpu_custom_call.1} parent=1 // pred_fallthru
      _
    // Predicated region
    $region42: #{tpu_custom_call.1} parent=1 // pred_check
      _
    $region43: #{tpu_custom_call.1} parent=1 // pred_check_branch
      %880 = sbr.rel (0) target = $region45
    $region44: #{tpu_custom_call.1} parent=1 // pred_region
      %s882 = ssub.s32 16, 16
      %883 = vsyncadd [#allocation5], %s882
      %886 = dma.smem_to_hbm [#allocation8], 16, %s6, [#allocation5]
    $region45: #{tpu_custom_call.1} parent=1 // pred_fallthru
      _
    // Predicated region
    $region46: #{tpu_custom_call.1} parent=1 // pred_check
      _
    $region47: #{tpu_custom_call.1} parent=1 // pred_check_branch
      %888 = sbr.rel (0) target = $region49
    $region48: #{tpu_custom_call.1} parent=1 // pred_region
      %889 = dma.done [#allocation5], 16
    $region49: #{tpu_custom_call.1} parent=1 // pred_fallthru
      _
    %890 = sfence
    %891 = vsyncpa [#allocation4], 1
    %892 = vsyncpa [#allocation7], 1
    %893 = vsyncpa [#allocation5], 1

</llo_original>
